<compile_context>
chip_gen: v5e
topology: v5e:2x2
jax: 0.10.0
libtpu: 0.0.40
codegen_flags: <defaults>
</compile_context>

<pallas_src>
import jax
import jax.numpy as jnp
from jax import lax
from jax.experimental import pallas as pl
from jax.experimental.pallas import tpu as pltpu

_OUT_PAD = 128  # lane-dense padded width of the final (…, 2) output


def _round_up(x, m):
    return (x + m - 1) // m * m


def _make_kernel(scale, seq_len):
    """scale = 1/(S-1); seq_len = original (unpadded) S, both compile-time."""

    def kernel(x_ref, mask_ref, w1_ref, b1_ref, w2_ref, b2_ref, w3_ref, b3_ref,
               o_ref, acc_ref):
        k = pl.program_id(1)  # seq-reduction axis (innermost)

        @pl.when(k == 0)
        def _init():
            acc_ref[...] = jnp.zeros_like(acc_ref)

        x = x_ref[...].astype(jnp.float32)        # (TB, TS, D)
        m = mask_ref[...].astype(jnp.float32)     # (TB, TS)  int8 -> f32
        ts = x.shape[1]

        # Fused per-(b,t) weight: attention mask * drop-token-0 * in-range * 1/(S-1).
        pos = k * ts + lax.broadcasted_iota(jnp.int32, (1, ts), 1)   # (1, TS)
        keep = (pos >= 1) & (pos < seq_len)
        m_eff = m * jnp.where(keep, jnp.float32(scale), jnp.float32(0.0))  # (TB, TS)
        # m_eff is exactly 0 at dropped / masked / out-of-range positions and is
        # always finite (int8 mask cannot be NaN).

        # OOB block contents of x are unspecified (may be NaN/Inf): remove them
        # with a select on m_eff != 0, never by relying on multiply-by-zero.
        m3 = m_eff[:, :, None]                                        # (TB, TS, 1)
        contrib = jnp.where(m3 != 0.0, x * m3, jnp.float32(0.0))
        acc_ref[...] += jnp.sum(contrib, axis=1)                      # (TB, D) f32

        @pl.when(k == pl.num_programs(1) - 1)
        def _finish():
            vec = acc_ref[...]                                              # (TB, D)
            h1 = jnp.dot(vec, w1_ref[...], preferred_element_type=jnp.float32)
            h1 = jnp.maximum(h1 + b1_ref[...], 0.0)                         # (TB, 256)
            h2 = jnp.dot(h1, w2_ref[...], preferred_element_type=jnp.float32)
            h2 = jnp.maximum(h2 + b2_ref[...], 0.0)                         # (TB, 64)
            out = jnp.dot(h2, w3_ref[...], preferred_element_type=jnp.float32)
            o_ref[...] = (out + b3_ref[...]).astype(o_ref.dtype)            # (TB, 128)

    return kernel


def mlp_classifier(last_hidden_state, attention_mask, params, *, batch_tile=128):
    """last_hidden_state: (B, S, D); attention_mask: (B, S) bool.

    Weights stored transposed vs. PyTorch, i.e. (in, out); biases (1, out).
    Returns (B, 2) float32 logits.
    """
    B, S, D = last_hidden_state.shape
    if S < 2:
        raise ValueError("S must be >= 2 (module divides by S-1).")
    w1, b1, w2, b2, w3, b3 = params

    # Lane-dense final layer: zero-pad the 2 output columns up to 128.
    w3p = jnp.pad(w3, ((0, 0), (0, _OUT_PAD - w3.shape[1])))
    b3p = jnp.pad(b3, ((0, 0), (0, _OUT_PAD - b3.shape[1])))

    x = last_hidden_state                        # NOT padded: no extra HBM pass
    mask_i8 = attention_mask.astype(jnp.int8)    # tiny; 4x less DMA than f32
    x_itemsize = x.dtype.itemsize

    # ---- VMEM budget (v7x-safe) ----------------------------------------------
    try:
        vmem_cap = int(pltpu.get_tpu_info().vmem_capacity_bytes)
    except Exception:
        vmem_cap = 64 << 20                      # assume smallest (v7x per-TC)
    vmem_budget = max(16 << 20, min(int(vmem_cap * 0.70), 56 << 20))

    wbytes = 4 * (D * 256 + 256 + 256 * 64 + 64 + 64 * _OUT_PAD + _OUT_PAD)

    # Per-element VMEM cost of the x stream: 2 pipeline buffers (input dtype)
    # plus ~2 block-sized f32 in-kernel temporaries (cast + masked product).
    elem_cost = 2 * x_itemsize + 2 * 4

    def _stream_budget(tb):
        fixed = (2 * wbytes                      # resident weights, double-buffered
                 + 2 * tb * _OUT_PAD * 4         # output block
                 + tb * D * 4                    # f32 accumulator scratch
                 + (2 << 20))                    # mask buffers + Mosaic internal slack
        return vmem_budget - fixed

    # ---- batch tile ------------------------------------------------------------
    TB = min(batch_tile, B)
    if TB < B:
        TB = max(8, (TB // 8) * 8)               # tiled case: multiple of 8
    # v7x megacore: give the parallel (batch) axis at least two tiles.
    if B > 8 and pl.cdiv(B, TB) < 2:
        TB = _round_up(pl.cdiv(B, 2), 8)
    # Large-D guard: shrink TB until the minimum-TS block (+ temps) fits.
    ts_min = min(S, 128)
    while TB > 8 and TB * ts_min * D * elem_cost > _stream_budget(TB):
        TB = max(8, ((TB - 1) // 8) * 8)

    # ---- seq tile (multiple of 128, or full S) ---------------------------------
    avail = max(_stream_budget(TB), TB * ts_min * D * elem_cost)
    if S <= 128 or TB * S * D * elem_cost <= avail:
        TS = S
    else:
        TS = max(128, (avail // (TB * D * elem_cost)) // 128 * 128)
        TS = min(TS, _round_up(S, 128))

    grid = (pl.cdiv(B, TB), pl.cdiv(S, TS))
    scale = 1.0 / (S - 1)

    # ---- VMEM limit / cost estimate --------------------------------------------
    needed = (2 * TB * TS * D * x_itemsize       # x blocks, double-buffered
              + 2 * TB * TS * D * 4              # in-kernel f32 temporaries
              + 2 * TB * TS                      # int8 mask blocks
              + 2 * wbytes                       # resident weights (2 buffers)
              + 2 * TB * _OUT_PAD * 4            # output block
              + TB * D * 4)                      # accumulator scratch
    vmem_limit = int(min(max(needed + (2 << 20), 16 << 20), vmem_budget))

    cost = pl.CostEstimate(
        flops=int(2 * B * S * D + 2 * B * (D * 256 + 256 * 64 + 64 * 2)),
        transcendentals=0,
        bytes_accessed=int(B * S * D * x_itemsize + B * S + wbytes + B * _OUT_PAD * 4),
    )

    out_padded = pl.pallas_call(
        _make_kernel(scale, S),
        out_shape=jax.ShapeDtypeStruct((B, _OUT_PAD), jnp.float32),
        grid_spec=pltpu.PrefetchScalarGridSpec(
            num_scalar_prefetch=0,
            grid=grid,
            in_specs=[
                pl.BlockSpec((TB, TS, D), lambda i, k: (i, k, 0)),   # x
                pl.BlockSpec((TB, TS), lambda i, k: (i, k)),         # mask (int8)
                pl.BlockSpec((D, 256), lambda i, k: (0, 0)),         # w1 (resident)
                pl.BlockSpec((1, 256), lambda i, k: (0, 0)),         # b1
                pl.BlockSpec((256, 64), lambda i, k: (0, 0)),        # w2
                pl.BlockSpec((1, 64), lambda i, k: (0, 0)),          # b2
                pl.BlockSpec((64, _OUT_PAD), lambda i, k: (0, 0)),   # w3 (padded)
                pl.BlockSpec((1, _OUT_PAD), lambda i, k: (0, 0)),    # b3 (padded)
            ],
            out_specs=pl.BlockSpec((TB, _OUT_PAD), lambda i, k: (i, 0)),
            scratch_shapes=[pltpu.VMEM((TB, D), jnp.float32)],       # masked-sum acc
        ),
        compiler_params=pltpu.CompilerParams(
            dimension_semantics=("parallel", "arbitrary"),
            vmem_limit_bytes=vmem_limit,
        ),
        cost_estimate=cost,
    )(x, mask_i8, w1, b1, w2, b2, w3p, b3p)

    return out_padded[:, :2]


def init_params(key, embed_dim):
    """Deterministic init. Weights stored as (in, out); biases as (1, out)."""
    ks = jax.random.split(key, 6)

    def linear(kw, kb, fan_in, fan_out):
        bound = 1.0 / jnp.sqrt(fan_in)
        w = jax.random.uniform(kw, (fan_in, fan_out), jnp.float32, -bound, bound)
        b = jax.random.uniform(kb, (1, fan_out), jnp.float32, -bound, bound)
        return w, b

    w1, b1 = linear(ks[0], ks[1], embed_dim, 256)
    w2, b2 = linear(ks[2], ks[3], 256, 64)
    w3, b3 = linear(ks[4], ks[5], 64, 2)
    return (w1, b1, w2, b2, w3, b3)


if __name__ == "__main__":
    B, S, D = 2, 8, 32   # embed_dim = 32

    key = jax.random.PRNGKey(0)
    k_x, k_m, k_p = jax.random.split(key, 3)

    last_hidden_state = jax.random.normal(k_x, (B, S, D), jnp.float32)
    attention_mask = jax.random.bernoulli(k_m, 0.8, (B, S))   # bool mask
    params = init_params(k_p, D)

    logits = mlp_classifier(last_hidden_state, attention_mask, params)
    jax.block_until_ready(logits)

    # Pure-JAX reference (same semantics as the PyTorch forward, return_prob=False).
    xm = last_hidden_state * attention_mask.astype(jnp.float32)[:, :, None]
    vec = jnp.mean(xm[:, 1:, :], axis=1)
    w1, b1, w2, b2, w3, b3 = params
    ref = jnp.maximum(vec @ w1 + b1, 0.0)
    ref = jnp.maximum(ref @ w2 + b2, 0.0)
    ref = ref @ w3 + b3

    assert logits.shape == (B, 2), logits.shape
    assert jnp.allclose(logits, ref, atol=1e-4, rtol=1e-4), "mismatch vs reference"

    print("KERNEL_OK")
</pallas_src>

<mosaic_0001>
module attributes {stable_mosaic.version = 11 : i64} {
  func.func @kernel(%arg0: i32, %arg1: i32, %arg2: memref<2x8x32xf32, #tpu.memory_space<vmem>>, %arg3: memref<2x8xi8, #tpu.memory_space<vmem>>, %arg4: memref<32x256xf32, #tpu.memory_space<vmem>>, %arg5: memref<1x256xf32, #tpu.memory_space<vmem>>, %arg6: memref<256x64xf32, #tpu.memory_space<vmem>>, %arg7: memref<1x64xf32, #tpu.memory_space<vmem>>, %arg8: memref<64x128xf32, #tpu.memory_space<vmem>>, %arg9: memref<1x128xf32, #tpu.memory_space<vmem>>, %arg10: memref<2x128xf32, #tpu.memory_space<vmem>>, %arg11: memref<2x32xf32, #tpu.memory_space<vmem>>) attributes {dimension_semantics = [#tpu.dimension_semantics<parallel>, #tpu.dimension_semantics<arbitrary>], iteration_bounds = array<i64: 1, 1>, scalar_prefetch = 0 : i64, scratch_operands = 1 : i64, tpu.core_type = #tpu.core_type<tc>, window_params = [{transform_indices = @transform_0, window_bounds = array<i64: 2, 8, 32>}, {transform_indices = @transform_1, window_bounds = array<i64: 2, 8>}, {pipeline_mode = #tpu.pipeline_mode<synchronous>, transform_indices = @transform_2, window_bounds = array<i64: 32, 256>}, {pipeline_mode = #tpu.pipeline_mode<synchronous>, transform_indices = @transform_3, window_bounds = array<i64: 1, 256>}, {pipeline_mode = #tpu.pipeline_mode<synchronous>, transform_indices = @transform_4, window_bounds = array<i64: 256, 64>}, {pipeline_mode = #tpu.pipeline_mode<synchronous>, transform_indices = @transform_5, window_bounds = array<i64: 1, 64>}, {pipeline_mode = #tpu.pipeline_mode<synchronous>, transform_indices = @transform_6, window_bounds = array<i64: 64, 128>}, {pipeline_mode = #tpu.pipeline_mode<synchronous>, transform_indices = @transform_7, window_bounds = array<i64: 1, 128>}, {transform_indices = @transform_8, window_bounds = array<i64: 2, 128>}]} {
    %c0_i32 = arith.constant 0 : i32
    %0 = arith.cmpi eq, %arg1, %c0_i32 : i32
    %1 = arith.extui %0 : i1 to i32
    %c0_i32_0 = arith.constant 0 : i32
    %2 = arith.cmpi ne, %1, %c0_i32_0 : i32
    scf.if %2 {
      %cst_16 = arith.constant 0.000000e+00 : f32
      %36 = vector.broadcast %cst_16 : f32 to vector<2x32xf32>
      %c0_17 = arith.constant 0 : index
      %c0_18 = arith.constant 0 : index
      %37 = vector.load %arg11[%c0_17, %c0_18] : memref<2x32xf32, #tpu.memory_space<vmem>>, vector<2x32xf32>
      tpu.vector_store %arg11[%c0_17, %c0_18], %36 {strides = array<i32>} : memref<2x32xf32, #tpu.memory_space<vmem>>, vector<2x32xf32>,
    } else {
    }
    %c0 = arith.constant 0 : index
    %c0_1 = arith.constant 0 : index
    %c0_2 = arith.constant 0 : index
    %3 = vector.load %arg2[%c0, %c0_1, %c0_2] : memref<2x8x32xf32, #tpu.memory_space<vmem>>, vector<2x8x32xf32>
    %c0_3 = arith.constant 0 : index
    %c0_4 = arith.constant 0 : index
    %4 = vector.load %arg3[%c0_3, %c0_4] : memref<2x8xi8, #tpu.memory_space<vmem>>, vector<2x8xi8>
    %5 = arith.sitofp %4 : vector<2x8xi8> to vector<2x8xf32>
    %c8_i32 = arith.constant 8 : i32
    %6 = arith.muli %arg1, %c8_i32 : i32
    %7 = tpu.iota {dimensions = array<i32: 1>} : vector<1x8xi32>
    %8 = vector.broadcast %6 : i32 to vector<1x8xi32>
    %9 = arith.addi %8, %7 : vector<1x8xi32>
    %c1_i32 = arith.constant 1 : i32
    %10 = vector.broadcast %c1_i32 : i32 to vector<1x8xi32>
    %11 = arith.cmpi sge, %9, %10 : vector<1x8xi32>
    %c8_i32_5 = arith.constant 8 : i32
    %12 = vector.broadcast %c8_i32_5 : i32 to vector<1x8xi32>
    %13 = arith.cmpi slt, %9, %12 : vector<1x8xi32>
    %14 = arith.andi %11, %13 : vector<1x8xi1>
    %cst = arith.constant 0.142857149 : f32
    %cst_6 = arith.constant 0.000000e+00 : f32
    %15 = vector.broadcast %cst : f32 to vector<1x8xf32>
    %16 = vector.broadcast %cst_6 : f32 to vector<1x8xf32>
    %17 = arith.select %14, %15, %16 : vector<1x8xi1>, vector<1x8xf32>
    %18 = vector.broadcast %17 : vector<1x8xf32> to vector<2x8xf32>
    %19 = arith.mulf %5, %18 : vector<2x8xf32>
    %20 = vector.shape_cast %19 : vector<2x8xf32> to vector<2x8x1xf32>
    %cst_7 = arith.constant 0.000000e+00 : f32
    %21 = vector.broadcast %cst_7 : f32 to vector<2x8x1xf32>
    %22 = arith.cmpf one, %20, %21 : vector<2x8x1xf32>
    %23 = vector.broadcast %20 : vector<2x8x1xf32> to vector<2x8x32xf32>
    %24 = arith.mulf %3, %23 : vector<2x8x32xf32>
    %cst_8 = arith.constant 0.000000e+00 : f32
    %25 = vector.shape_cast %22 : vector<2x8x1xi1> to vector<2x8x1xi1>
    %26 = vector.broadcast %25 : vector<2x8x1xi1> to vector<2x8x32xi1>
    %27 = vector.broadcast %cst_8 : f32 to vector<2x8x32xf32>
    %28 = arith.select %26, %24, %27 : vector<2x8x32xi1>, vector<2x8x32xf32>
    %c0_9 = arith.constant 0 : index
    %c0_10 = arith.constant 0 : index
    %29 = vector.load %arg11[%c0_9, %c0_10] : memref<2x32xf32, #tpu.memory_space<vmem>>, vector<2x32xf32>
    %cst_11 = arith.constant dense<0.000000e+00> : vector<2x32xf32>
    %30 = vector.multi_reduction <add>, %28, %cst_11 [1] : vector<2x8x32xf32> to vector<2x32xf32>
    %31 = arith.addf %29, %30 : vector<2x32xf32>
    %c0_12 = arith.constant 0 : index
    %c0_13 = arith.constant 0 : index
    %32 = vector.load %arg11[%c0_12, %c0_13] : memref<2x32xf32, #tpu.memory_space<vmem>>, vector<2x32xf32>
    tpu.vector_store %arg11[%c0_12, %c0_13], %31 {strides = array<i32>} : memref<2x32xf32, #tpu.memory_space<vmem>>, vector<2x32xf32>,
    %c0_i32_14 = arith.constant 0 : i32
    %33 = arith.cmpi eq, %arg1, %c0_i32_14 : i32
    %34 = arith.extui %33 : i1 to i32
    %c0_i32_15 = arith.constant 0 : i32
    %35 = arith.cmpi ne, %34, %c0_i32_15 : i32
    scf.if %35 {
      %c0_16 = arith.constant 0 : index
      %c0_17 = arith.constant 0 : index
      %36 = vector.load %arg11[%c0_16, %c0_17] : memref<2x32xf32, #tpu.memory_space<vmem>>, vector<2x32xf32>
      %c0_18 = arith.constant 0 : index
      %c0_19 = arith.constant 0 : index
      %37 = vector.load %arg4[%c0_18, %c0_19] : memref<32x256xf32, #tpu.memory_space<vmem>>, vector<32x256xf32>
      %cst_20 = arith.constant dense<0.000000e+00> : vector<2x256xf32>
      %38 = tpu.matmul %36, %37, %cst_20 {dimension_numbers = #tpu.dot_dimension_numbers<[1], [0], [0], [1], [0, 0, 1, 1], [], []>} : vector<2x32xf32>, vector<32x256xf32>, vector<2x256xf32> -> vector<2x256xf32>
      %c0_21 = arith.constant 0 : index
      %c0_22 = arith.constant 0 : index
      %39 = vector.load %arg5[%c0_21, %c0_22] : memref<1x256xf32, #tpu.memory_space<vmem>>, vector<1x256xf32>
      %40 = vector.broadcast %39 : vector<1x256xf32> to vector<2x256xf32>
      %41 = arith.addf %38, %40 : vector<2x256xf32>
      %cst_23 = arith.constant 0.000000e+00 : f32
      %42 = vector.broadcast %cst_23 : f32 to vector<2x256xf32>
      %43 = arith.maximumf %41, %42 : vector<2x256xf32>
      %c0_24 = arith.constant 0 : index
      %c0_25 = arith.constant 0 : index
      %44 = vector.load %arg6[%c0_24, %c0_25] : memref<256x64xf32, #tpu.memory_space<vmem>>, vector<256x64xf32>
      %cst_26 = arith.constant dense<0.000000e+00> : vector<2x64xf32>
      %45 = tpu.matmul %43, %44, %cst_26 {dimension_numbers = #tpu.dot_dimension_numbers<[1], [0], [0], [1], [0, 0, 1, 1], [], []>} : vector<2x256xf32>, vector<256x64xf32>, vector<2x64xf32> -> vector<2x64xf32>
      %c0_27 = arith.constant 0 : index
      %c0_28 = arith.constant 0 : index
      %46 = vector.load %arg7[%c0_27, %c0_28] : memref<1x64xf32, #tpu.memory_space<vmem>>, vector<1x64xf32>
      %47 = vector.broadcast %46 : vector<1x64xf32> to vector<2x64xf32>
      %48 = arith.addf %45, %47 : vector<2x64xf32>
      %cst_29 = arith.constant 0.000000e+00 : f32
      %49 = vector.broadcast %cst_29 : f32 to vector<2x64xf32>
      %50 = arith.maximumf %48, %49 : vector<2x64xf32>
      %c0_30 = arith.constant 0 : index
      %c0_31 = arith.constant 0 : index
      %51 = vector.load %arg8[%c0_30, %c0_31] : memref<64x128xf32, #tpu.memory_space<vmem>>, vector<64x128xf32>
      %cst_32 = arith.constant dense<0.000000e+00> : vector<2x128xf32>
      %52 = tpu.matmul %50, %51, %cst_32 {dimension_numbers = #tpu.dot_dimension_numbers<[1], [0], [0], [1], [0, 0, 1, 1], [], []>} : vector<2x64xf32>, vector<64x128xf32>, vector<2x128xf32> -> vector<2x128xf32>
      %c0_33 = arith.constant 0 : index
      %c0_34 = arith.constant 0 : index
      %53 = vector.load %arg9[%c0_33, %c0_34] : memref<1x128xf32, #tpu.memory_space<vmem>>, vector<1x128xf32>
      %54 = vector.broadcast %53 : vector<1x128xf32> to vector<2x128xf32>
      %55 = arith.addf %52, %54 : vector<2x128xf32>
      %c0_35 = arith.constant 0 : index
      %c0_36 = arith.constant 0 : index
      %56 = vector.load %arg10[%c0_35, %c0_36] : memref<2x128xf32, #tpu.memory_space<vmem>>, vector<2x128xf32>
      tpu.vector_store %arg10[%c0_35, %c0_36], %55 {strides = array<i32>} : memref<2x128xf32, #tpu.memory_space<vmem>>, vector<2x128xf32>,
    } else {
    }
    return
  }
  func.func @transform_0(%arg0: i32, %arg1: i32) -> (i32, i32, i32) {
    %c0_i32 = arith.constant 0 : i32
    %c0_i32_0 = arith.constant 0 : i32
    return %arg0, %arg1, %c0_i32 : i32, i32, i32
  }
  func.func @transform_1(%arg0: i32, %arg1: i32) -> (i32, i32) {
    %c0_i32 = arith.constant 0 : i32
    return %arg0, %arg1 : i32, i32
  }
  func.func @transform_2(%arg0: i32, %arg1: i32) -> (i32, i32) {
    %c0_i32 = arith.constant 0 : i32
    %c0_i32_0 = arith.constant 0 : i32
    %c0_i32_1 = arith.constant 0 : i32
    return %c0_i32, %c0_i32_0 : i32, i32
  }
  func.func @transform_3(%arg0: i32, %arg1: i32) -> (i32, i32) {
    %c0_i32 = arith.constant 0 : i32
    %c0_i32_0 = arith.constant 0 : i32
    %c0_i32_1 = arith.constant 0 : i32
    return %c0_i32, %c0_i32_0 : i32, i32
  }
  func.func @transform_4(%arg0: i32, %arg1: i32) -> (i32, i32) {
    %c0_i32 = arith.constant 0 : i32
    %c0_i32_0 = arith.constant 0 : i32
    %c0_i32_1 = arith.constant 0 : i32
    return %c0_i32, %c0_i32_0 : i32, i32
  }
  func.func @transform_5(%arg0: i32, %arg1: i32) -> (i32, i32) {
    %c0_i32 = arith.constant 0 : i32
    %c0_i32_0 = arith.constant 0 : i32
    %c0_i32_1 = arith.constant 0 : i32
    return %c0_i32, %c0_i32_0 : i32, i32
  }
  func.func @transform_6(%arg0: i32, %arg1: i32) -> (i32, i32) {
    %c0_i32 = arith.constant 0 : i32
    %c0_i32_0 = arith.constant 0 : i32
    %c0_i32_1 = arith.constant 0 : i32
    return %c0_i32, %c0_i32_0 : i32, i32
  }
  func.func @transform_7(%arg0: i32, %arg1: i32) -> (i32, i32) {
    %c0_i32 = arith.constant 0 : i32
    %c0_i32_0 = arith.constant 0 : i32
    %c0_i32_1 = arith.constant 0 : i32
    return %c0_i32, %c0_i32_0 : i32, i32
  }
  func.func @transform_8(%arg0: i32, %arg1: i32) -> (i32, i32) {
    %c0_i32 = arith.constant 0 : i32
    %c0_i32_0 = arith.constant 0 : i32
    return %arg0, %c0_i32 : i32, i32
  }
}

</mosaic_0001>

<llo_original>
// kernel: tpu_custom_call.1
$region0: #{tpu_custom_call.1}
  #allocation0 [shape = 'u32[]', space=smem, size = 0x4, offset = 0x4, fixed_abs, tag = 'smem constant byte address 0x4 - core index']
  #allocation1 [shape = 'u32[72,128]{1,0:T(1,128)}', space=vmem, size = 0x9000, scoped, tag = 'internal scratch']
  #allocation2 [shape = 'f32[2,32]{1,0:T(2,128)}', space=vmem, size = 0x400, scoped, tag = 'scratch operand']
  %s0 = inlined_call_operand.vmem [shape: f32[2,8,32], index: 0, kind: input, shape index: {}]
  %s1 = inlined_call_operand.vmem [shape: s8[2,8], index: 1, kind: input, shape index: {}]
  %s2 = inlined_call_operand.vmem [shape: f32[32,256], index: 2, kind: input, shape index: {}]
  %s3 = inlined_call_operand.vmem [shape: f32[1,256], index: 3, kind: input, shape index: {}]
  %s4 = inlined_call_operand.vmem [shape: f32[256,64], index: 4, kind: input, shape index: {}]
  %s5 = inlined_call_operand.vmem [shape: f32[1,64], index: 5, kind: input, shape index: {}]
  %s6 = inlined_call_operand.vmem [shape: f32[64,128], index: 6, kind: input, shape index: {}]
  %s7 = inlined_call_operand.vmem [shape: f32[1,128], index: 7, kind: input, shape index: {}]
  %s8 = inlined_call_operand.hbm [shape: f32[2,128], index: 8, kind: output, shape index: {}]
  %s9 = sld [smem:[#allocation0]]
  $region50: #{tpu_custom_call.1} parent=0
    _
  %s11 = ssub.s32 1, %s9
  %s12 = scalar_select 0, %s11, %s9
  $region1: #{tpu_custom_call.1} parent=0
    #allocation3 [shape = 'u8[1024]{0}', space=vmem, size = 0x400, scoped, tag = 'output window, operand 0, single buffered']
    #allocation4 [shape = 's32[1]{0}', space=sflag, size = 0x4, scoped, tag = 'scoped memory for tpu_custom_call.1']
    %13 = vsyncpa [#allocation4], 0
    // Predicated region
    $region2: #{tpu_custom_call.1} parent=1 // pred_check
      _
    $region3: #{tpu_custom_call.1} parent=1 // pred_check_branch
      %15 = sbr.rel (0) target = $region5
    $region4: #{tpu_custom_call.1} parent=1 // pred_region
      _
    $region5: #{tpu_custom_call.1} parent=1 // pred_fallthru
      _
    // Predicated region
    $region6: #{tpu_custom_call.1} parent=1 // pred_check
      _
    $region7: #{tpu_custom_call.1} parent=1 // pred_check_branch
      %17 = sbr.rel (0) target = $region9
    $region8: #{tpu_custom_call.1} parent=1 // pred_region
      _
    $region9: #{tpu_custom_call.1} parent=1 // pred_fallthru
      _
    // Predicated region
    $region10: #{tpu_custom_call.1} parent=1 // pred_check
      _
    $region11: #{tpu_custom_call.1} parent=1 // pred_check_branch
      %19 = sbr.rel (0) target = $region13
    $region12: #{tpu_custom_call.1} parent=1 // pred_region
      _
    $region13: #{tpu_custom_call.1} parent=1 // pred_fallthru
      _
    // Predicated region
    $region14: #{tpu_custom_call.1} parent=1 // pred_check
      _
    $region15: #{tpu_custom_call.1} parent=1 // pred_check_branch
      %21 = sbr.rel (0) target = $region17
    $region16: #{tpu_custom_call.1} parent=1 // pred_region
      _
    $region17: #{tpu_custom_call.1} parent=1 // pred_fallthru
      _
    // Predicated region
    $region18: #{tpu_custom_call.1} parent=1 // pred_check
      _
    $region19: #{tpu_custom_call.1} parent=1 // pred_check_branch
      %23 = sbr.rel (0) target = $region21
    $region20: #{tpu_custom_call.1} parent=1 // pred_region
      _
    $region21: #{tpu_custom_call.1} parent=1 // pred_fallthru
      _
    // Predicated region
    $region22: #{tpu_custom_call.1} parent=1 // pred_check
      _
    $region23: #{tpu_custom_call.1} parent=1 // pred_check_branch
      %25 = sbr.rel (0) target = $region25
    $region24: #{tpu_custom_call.1} parent=1 // pred_region
      _
    $region25: #{tpu_custom_call.1} parent=1 // pred_fallthru
      _
    // Predicated region
    $region26: #{tpu_custom_call.1} parent=1 // pred_check
      _
    $region27: #{tpu_custom_call.1} parent=1 // pred_check_branch
      %27 = sbr.rel (0) target = $region29
    $region28: #{tpu_custom_call.1} parent=1 // pred_region
      _
    $region29: #{tpu_custom_call.1} parent=1 // pred_fallthru
      _
    // Predicated region
    $region30: #{tpu_custom_call.1} parent=1 // pred_check
      _
    $region31: #{tpu_custom_call.1} parent=1 // pred_check_branch
      %29 = sbr.rel (0) target = $region33
    $region32: #{tpu_custom_call.1} parent=1 // pred_region
      _
    $region33: #{tpu_custom_call.1} parent=1 // pred_fallthru
      _
    %p30 = scmp.eq.s32.totalorder 0, 0
    // Predicated region
    $region34: #{tpu_custom_call.1} parent=1 // pred_check
      %p31 = pneg %p30
    $region35: #{tpu_custom_call.1} parent=1 // pred_check_branch
      %33 = sbr.rel (%p31) target = $region37
    $region36: #{tpu_custom_call.1} parent=1 // pred_region
      %vm34 = vcmask 254976
      %35 = vst.msk [vmem:[#allocation2] sm:$0x3] %vm34, 0.0
    $region37: #{tpu_custom_call.1} parent=1 // pred_fallthru
      _
    %v36 = vld [vmem:[%s0] sm:$0xff]
    %v37 = vld [vmem:[%s0 + $0x8] sm:$0xff]
    %v38 = vld [vmem:[%s1] sm:$0x1]
    %v39 = vunpack.c.0.s8 %v38
    %v40 = vcvt.s32.f32 %v39
    %s41 = smul.u32 0, 8
    %v42 = vlaneseq
    %v43 = vand.u32 %v42, 127
    %v44 = vstv %s41
    %v45 = vadd.s32 %v44, %v43
    %vm46 = vcmp.ge.s32.totalorder %v45, 1
    %vm47 = vcmp.lt.s32.totalorder %v45, 8
    %vm48 = vmand %vm46, %vm47
    %v49 = vsel %vm48, 0.14285715, 0.0
    %v50 = vmul.f32 %v40, %v49
    %v51 = vperm.slane %v50, 0
    %v52 = vlaneseq
    %v53 = vshrl.u32 %v52, 7
    %55 = vset.pattern.permute.xlu0 %v53
    %56 = vperm.xlu0 %55, %v51
    %v57 = vpop.permute.xlu0 %56
    %v58 = vperm.slane %v50, 1
    %v59 = vlaneseq
    %v60 = vshrl.u32 %v59, 7
    %62 = vset.pattern.permute.xlu0 %v60
    %63 = vperm.xlu0 %62, %v58
    %v64 = vpop.permute.xlu0 %63
    %vm65 = vcmp.ne.f32.partialorder %v57, 0.0
    %vm66 = vcmp.ne.f32.partialorder %v64, 0.0
    %v67 = vmul.f32 %v36, %v57
    %v68 = vmul.f32 %v37, %v64
    %v69 = vsel %vm65, 1, 0
    %v70 = vsel %vm66, 1, 0
    %vm71 = vcmp.eq.s32.totalorder %v69, 1
    %vm72 = vcmp.eq.s32.totalorder %v70, 1
    %v73 = vsel %vm71, %v67, 0.0
    %v74 = vsel %vm72, %v68, 0.0
    %v75 = vld [vmem:[#allocation2] sm:$0x3]
    %vm76 = vcmask 261120
    %v77 = vsel %vm76, %v73, 0.0
    %v78 = vrot.slane %v77, 4
    %v79 = vadd.f32 %v77, %v78
    %v80 = vrot.slane %v79, 2
    %v81 = vadd.f32 %v79, %v80
    %v82 = vrot.slane %v81, 1
    %v83 = vadd.f32 %v81, %v82
    %v84 = vsel %vm76, %v74, 0.0
    %v85 = vrot.slane %v84, 4
    %v86 = vadd.f32 %v84, %v85
    %v87 = vrot.slane %v86, 2
    %v88 = vadd.f32 %v86, %v87
    %v89 = vrot.slane %v88, 1
    %v90 = vadd.f32 %v88, %v89
    %vm93 = vcmask 1041409
    %v94 = vsel %vm93, %v90, %v83
    %v96 = vadd.f32 %v75, %v94
    %vm97 = vcmask 254976
    %98 = vst.msk [vmem:[#allocation2] sm:$0x3] %vm97, %v96
    // Predicated region
    $region38: #{tpu_custom_call.1} parent=1 // pred_check
      %p99 = pneg %p30
    $region39: #{tpu_custom_call.1} parent=1 // pred_check_branch
      %101 = sbr.rel (%p99) target = $region41
    $region40: #{tpu_custom_call.1} parent=1 // pred_region
      %v102 = vld [vmem:[#allocation2] sm:$0x3]
      %v103 = vld [vmem:[%s2] sm:$0xff]
      %v104 = vld [vmem:[%s2 + $0x8] sm:$0xff]
      %v105 = vld [vmem:[%s2 + $0x10] sm:$0xff]
      %v106 = vld [vmem:[%s2 + $0x18] sm:$0xff]
      %v107 = vld [vmem:[%s2 + $0x20] sm:$0xff]
      %v108 = vld [vmem:[%s2 + $0x28] sm:$0xff]
      %v109 = vld [vmem:[%s2 + $0x30] sm:$0xff]
      %v110 = vld [vmem:[%s2 + $0x38] sm:$0xff]
      %v111 = vld [vmem:[%s3] sm:$0x3]
      %v113 = vperm.slane %v111, 0
      %v114 = vperm.slane %v111, 1
      %v118 = vsel %vm76, %v102, 0
      %120 = vmatpush.msra.mxu0 0.0
      %121 = vmatpush.msra.mxu0 0.0
      %122 = vmatpush.msra.mxu0 0.0
      %123 = vmatpush.msra.mxu0 0.0
      %124 = vmatpush.msra.mxu0 0.0
      %125 = vmatpush.msra.mxu0 0.0
      %126 = vmatpush.msra.mxu0 0.0
      %127 = vmatpush.msra.mxu0 0.0
      %128 = vmatpush.msra.mxu0 0.0
      %129 = vmatpush.msra.mxu0 0.0
      %130 = vmatpush.msra.mxu0 0.0
      %131 = vmatpush.msra.mxu0 0.0
      %132 = vmatpush.msra.mxu0 %v109
      %133 = vmatpush.msra.mxu0 %v107
      %134 = vmatpush.msra.mxu0 %v105
      %135 = vmatpush.msra.mxu0 %v103
      %136 = vmatmul.f32.gmra.mxu0 %v118
      %v137 = vpop.f32.mrf.mxu0
      %v138 = vadd.f32 %v113, %v137
      %139 = vdwg.mxu0
      %140 = vmatpush.msra.mxu0 0.0
      %141 = vmatpush.msra.mxu0 0.0
      %142 = vmatpush.msra.mxu0 0.0
      %143 = vmatpush.msra.mxu0 0.0
      %144 = vmatpush.msra.mxu0 0.0
      %145 = vmatpush.msra.mxu0 0.0
      %146 = vmatpush.msra.mxu0 0.0
      %147 = vmatpush.msra.mxu0 0.0
      %148 = vmatpush.msra.mxu0 0.0
      %149 = vmatpush.msra.mxu0 0.0
      %150 = vmatpush.msra.mxu0 0.0
      %151 = vmatpush.msra.mxu0 0.0
      %152 = vmatpush.msra.mxu0 %v110
      %153 = vmatpush.msra.mxu0 %v108
      %154 = vmatpush.msra.mxu0 %v106
      %155 = vmatpush.msra.mxu0 %v104
      %156 = vmatmul.f32.gmra.mxu0 %v118
      %v157 = vpop.f32.mrf.mxu0
      %v158 = vadd.f32 %v114, %v157
      %159 = vdwg.mxu0
      %v160 = vmax.f32 %v138, 0.0
      %v161 = vmax.f32 %v158, 0.0
      %v162 = vld [vmem:[%s4] sm:$0xff]
      %v163 = vld [vmem:[%s4 + $0x8] sm:$0xff]
      %v164 = vld [vmem:[%s4 + $0x10] sm:$0xff]
      %v165 = vld [vmem:[%s4 + $0x18] sm:$0xff]
      %v166 = vld [vmem:[%s4 + $0x20] sm:$0xff]
      %v167 = vld [vmem:[%s4 + $0x28] sm:$0xff]
      %v168 = vld [vmem:[%s4 + $0x30] sm:$0xff]
      %v169 = vld [vmem:[%s4 + $0x38] sm:$0xff]
      %v170 = vld [vmem:[%s4 + $0x40] sm:$0xff]
      %v171 = vld [vmem:[%s4 + $0x48] sm:$0xff]
      %v172 = vld [vmem:[%s4 + $0x50] sm:$0xff]
      %v173 = vld [vmem:[%s4 + $0x58] sm:$0xff]
      %v174 = vld [vmem:[%s4 + $0x60] sm:$0xff]
      %v175 = vld [vmem:[%s4 + $0x68] sm:$0xff]
      %v176 = vld [vmem:[%s4 + $0x70] sm:$0xff]
      %v177 = vld [vmem:[%s4 + $0x78] sm:$0xff]
      %v178 = vld [vmem:[%s4 + $0x80] sm:$0xff]
      %v179 = vld [vmem:[%s4 + $0x88] sm:$0xff]
      %v180 = vld [vmem:[%s4 + $0x90] sm:$0xff]
      %v181 = vld [vmem:[%s4 + $0x98] sm:$0xff]
      %v182 = vld [vmem:[%s4 + $0xa0] sm:$0xff]
      %v183 = vld [vmem:[%s4 + $0xa8] sm:$0xff]
      %v184 = vld [vmem:[%s4 + $0xb0] sm:$0xff]
      %v185 = vld [vmem:[%s4 + $0xb8] sm:$0xff]
      %v186 = vld [vmem:[%s4 + $0xc0] sm:$0xff]
      %v187 = vld [vmem:[%s4 + $0xc8] sm:$0xff]
      %v188 = vld [vmem:[%s4 + $0xd0] sm:$0xff]
      %v189 = vld [vmem:[%s4 + $0xd8] sm:$0xff]
      %v190 = vld [vmem:[%s4 + $0xe0] sm:$0xff]
      %v191 = vld [vmem:[%s4 + $0xe8] sm:$0xff]
      %v192 = vld [vmem:[%s4 + $0xf0] sm:$0xff]
      %v193 = vld [vmem:[%s4 + $0xf8] sm:$0xff]
      %v194 = vld [vmem:[%s5] sm:$0x1]
      %v196 = vperm.slane %v194, 0
      %198 = vmatpush.msra.mxu0 %v177
      %199 = vmatpush.msra.mxu0 %v176
      %200 = vmatpush.msra.mxu0 %v175
      %201 = vmatpush.msra.mxu0 %v174
      %202 = vmatpush.msra.mxu0 %v173
      %203 = vmatpush.msra.mxu0 %v172
      %204 = vmatpush.msra.mxu0 %v171
      %205 = vmatpush.msra.mxu0 %v170
      %206 = vmatpush.msra.mxu0 %v169
      %207 = vmatpush.msra.mxu0 %v168
      %208 = vmatpush.msra.mxu0 %v167
      %209 = vmatpush.msra.mxu0 %v166
      %210 = vmatpush.msra.mxu0 %v165
      %211 = vmatpush.msra.mxu0 %v164
      %212 = vmatpush.msra.mxu0 %v163
      %213 = vmatpush.msra.mxu0 %v162
      %214 = vmatmul.f32.gmra.mxu0 %v160
      %v215 = vpop.f32.mrf.mxu0
      %v216 = vadd.f32 %v196, %v215
      %217 = vdwg.mxu0
      %218 = vmatpush.msra.mxu0 %v193
      %219 = vmatpush.msra.mxu0 %v192
      %220 = vmatpush.msra.mxu0 %v191
      %221 = vmatpush.msra.mxu0 %v190
      %222 = vmatpush.msra.mxu0 %v189
      %223 = vmatpush.msra.mxu0 %v188
      %224 = vmatpush.msra.mxu0 %v187
      %225 = vmatpush.msra.mxu0 %v186
      %226 = vmatpush.msra.mxu0 %v185
      %227 = vmatpush.msra.mxu0 %v184
      %228 = vmatpush.msra.mxu0 %v183
      %229 = vmatpush.msra.mxu0 %v182
      %230 = vmatpush.msra.mxu0 %v181
      %231 = vmatpush.msra.mxu0 %v180
      %232 = vmatpush.msra.mxu0 %v179
      %233 = vmatpush.msra.mxu0 %v178
      %234 = vmatmul.f32.gmra.mxu0 %v161
      %v235 = vpop.f32.mrf.mxu0
      %v236 = vadd.f32 %v216, %v235
      %237 = vdwg.mxu0
      %v238 = vmax.f32 %v236, 0.0
      %v239 = vld [vmem:[%s6] sm:$0xff]
      %v240 = vld [vmem:[%s6 + $0x8] sm:$0xff]
      %v241 = vld [vmem:[%s6 + $0x10] sm:$0xff]
      %v242 = vld [vmem:[%s6 + $0x18] sm:$0xff]
      %v243 = vld [vmem:[%s6 + $0x20] sm:$0xff]
      %v244 = vld [vmem:[%s6 + $0x28] sm:$0xff]
      %v245 = vld [vmem:[%s6 + $0x30] sm:$0xff]
      %v246 = vld [vmem:[%s6 + $0x38] sm:$0xff]
      %v247 = vld [vmem:[%s7] sm:$0x1]
      %v249 = vperm.slane %v247, 0
      %vm251 = vcmask 523264
      %v253 = vsel %vm251, %v238, 0
      %255 = vmatpush.msra.mxu0 0.0
      %256 = vmatpush.msra.mxu0 0.0
      %257 = vmatpush.msra.mxu0 0.0
      %258 = vmatpush.msra.mxu0 0.0
      %259 = vmatpush.msra.mxu0 0.0
      %260 = vmatpush.msra.mxu0 0.0
      %261 = vmatpush.msra.mxu0 0.0
      %262 = vmatpush.msra.mxu0 0.0
      %263 = vmatpush.msra.mxu0 %v246
      %264 = vmatpush.msra.mxu0 %v245
      %265 = vmatpush.msra.mxu0 %v244
      %266 = vmatpush.msra.mxu0 %v243
      %267 = vmatpush.msra.mxu0 %v242
      %268 = vmatpush.msra.mxu0 %v241
      %269 = vmatpush.msra.mxu0 %v240
      %270 = vmatpush.msra.mxu0 %v239
      %271 = vmatmul.f32.gmra.mxu0 %v253
      %v272 = vpop.f32.mrf.mxu0
      %v273 = vadd.f32 %v249, %v272
      %274 = vdwg.mxu0
      %275 = vst [vmem:[#allocation3] sm:$0x3] %v273
    $region41: #{tpu_custom_call.1} parent=1 // pred_fallthru
      _
    // Predicated region
    $region42: #{tpu_custom_call.1} parent=1 // pred_check
      _
    $region43: #{tpu_custom_call.1} parent=1 // pred_check_branch
      %277 = sbr.rel (0) target = $region45
    $region44: #{tpu_custom_call.1} parent=1 // pred_region
      %279 = vsyncadd [#allocation4], 0
      %s281 = sshll.u32 [#allocation3], 4
      %s282 = int_to_ptr.vmem [resolvable:$true] %s281
      %s283 = sshll.u32 %s8, 4
      %s284 = int_to_ptr.hbm [resolvable:$true] %s283
      %286 = dma.vmem_to_hbm [thread:$0]  %s282, 32, %s284, [#allocation4]
    $region45: #{tpu_custom_call.1} parent=1 // pred_fallthru
      _
    // Predicated region
    $region46: #{tpu_custom_call.1} parent=1 // pred_check
      _
    $region47: #{tpu_custom_call.1} parent=1 // pred_check_branch
      %288 = sbr.rel (0) target = $region49
    $region48: #{tpu_custom_call.1} parent=1 // pred_region
      %290 = dma.done [#allocation4], 32
    $region49: #{tpu_custom_call.1} parent=1 // pred_fallthru
      _
    %291 = vsyncpa [#allocation4], 1

</llo_original>
